<compile_context>
chip_gen: v7x
topology: tpu7x:2x2x1
jax: 0.10.0
libtpu: 0.0.40
codegen_flags: <defaults>
</compile_context>

<pallas_src>
import functools

import jax
import jax.numpy as jnp
from jax.experimental import pallas as pl
from jax.experimental.pallas import tpu as pltpu

LN_EPS = 1e-5


def _round_up(x, m):
    return ((x + m - 1) // m) * m


def conv_ln_kernel(p_ref, w_ref, bgb_ref, o_ref, *, n_true, pack_r):
    """Fused conv-as-matmul + bias + LayerNorm on one (packed) row tile.

    p_ref   : (tm//r, r*Kp) bf16  im2col patches, r consecutive tokens per row
    w_ref   : (r*Kp, r*N)   bf16  block-diagonal conv weight
    bgb_ref : (3, r*N)      f32   rows = [conv bias, LN gamma, LN beta], tiled r times
    o_ref   : (tm//r, r*N)        packed output tile (lane-dense stores)
    """
    y = jnp.dot(p_ref[...], w_ref[...],
                preferred_element_type=jnp.float32) + bgb_ref[0:1, :]

    inv_n = 1.0 / n_true
    if pack_r == 1:
        mean = jnp.sum(y, axis=-1, keepdims=True) * inv_n
        yc = y - mean
        var = jnp.sum(yc * yc, axis=-1, keepdims=True) * inv_n
    else:
        # Segmented all-reduce over aligned power-of-two segments of n_true
        # lanes (pack_r * n_true == 128): log2(n_true) XOR-butterfly steps of
        # pltpu.roll (XLU) + select/add (VPU), entirely in f32.  No MXU flops,
        # result already broadcast across each token's lanes.
        lanes = pack_r * n_true
        lane = jax.lax.broadcasted_iota(jnp.int32, y.shape, y.ndim - 1)

        def seg_allsum(v):
            d = 1
            while d < n_true:
                up = pltpu.roll(v, lanes - d, axis=v.ndim - 1)   # up[i] = v[i + d]
                dn = pltpu.roll(v, d, axis=v.ndim - 1)           # dn[i] = v[i - d]
                v = v + jnp.where((lane & d) == 0, up, dn)       # partner = lane ^ d
                d *= 2
            return v

        mean = seg_allsum(y) * inv_n
        yc = y - mean
        var = seg_allsum(yc * yc) * inv_n        # centered two-pass variance

    rstd = jax.lax.rsqrt(var + LN_EPS)
    o_ref[...] = (yc * rstd * bgb_ref[1:2, :] + bgb_ref[2:3, :]).astype(o_ref.dtype)


def _im2col(x, k, stride, pad, dtype):
    """x: (B, C, H, W) -> (B*Ho*Wo, C*k*k) patches in `dtype`, (c, kh, kw) order."""
    B, C, H, W = x.shape
    Ho = (H + 2 * pad - k) // stride + 1
    Wo = (W + 2 * pad - k) // stride + 1
    xp = jnp.pad(x.astype(dtype), ((0, 0), (0, 0), (pad, pad), (pad, pad)))
    cols = []
    for ki in range(k):
        for kj in range(k):
            cols.append(
                xp[:, :, ki:ki + (Ho - 1) * stride + 1:stride,
                         kj:kj + (Wo - 1) * stride + 1:stride])   # (B, C, Ho, Wo)
    patches = jnp.stack(cols, axis=2)                              # (B, C, k*k, Ho, Wo)
    patches = patches.transpose(0, 3, 4, 1, 2).reshape(B * Ho * Wo, C * k * k)
    return patches, Ho, Wo


@functools.partial(jax.jit,
                   static_argnames=("kernel_size", "stride", "compute_dtype",
                                    "out_dtype", "target_tile_bytes"))
def conv_token_embedding(x, w, b, gamma, beta, *, kernel_size, stride,
                         compute_dtype=jnp.bfloat16, out_dtype=None,
                         target_tile_bytes=2 << 20):
    """x: (B, C_in, H, W) NCHW. Returns (B, Ho*Wo, C_out) = Conv2d -> flatten -> LN."""
    B, C_in, H, W = x.shape
    C_out = w.shape[0]
    k = kernel_size
    pad = (k - 1) // 2
    # Pass out_dtype=jnp.bfloat16 when the consumer accepts it: halves the
    # output HBM write on this bandwidth-bound op. Default keeps f32 semantics.
    out_dtype = x.dtype if out_dtype is None else out_dtype

    patches, Ho, Wo = _im2col(x, k, stride, pad, compute_dtype)    # (M, K) bf16
    M = B * Ho * Wo
    K = C_in * k * k
    N = C_out

    # --- lane-dense packing factor: r tokens per 128-lane output row --------
    if N % 128 == 0:
        r = 1
    elif N < 128 and (N & (N - 1)) == 0:   # power of two -> XOR butterfly works
        r = 128 // N
    else:
        r = 1   # fallback: masked (sub-128-lane) stores; correct, not lane-dense

    # --- pad K to a lane multiple only when cheap (op is HBM-bound) ---------
    K128 = _round_up(K, 128)
    Kp = K128 if 4 * K128 <= 5 * K else K

    ib = jnp.dtype(compute_dtype).itemsize
    ob = jnp.dtype(out_dtype).itemsize

    # --- hardware-derived VMEM budget (v7x: ~48 MiB, v5e/v6e: ~96 MiB) ------
    try:
        vmem_cap = int(pltpu.get_tpu_info().vmem_capacity_bytes)
    except Exception:
        vmem_cap = 64 << 20            # conservative (v7x-sized) fallback
    vmem_limit = int(min(max(int(0.75 * vmem_cap), 32 << 20), 100 << 20))

    # --- adaptive row tile ---------------------------------------------------
    # ~2 MiB of patch bytes per grid step amortizes the ~0.35us/step overhead.
    tm = max(512, int(target_tile_bytes) // max(Kp * ib, 1))
    # Keep >= 4 grid steps so both v7x TensorCores get balanced work.
    tm = min(tm, max(8 * r, _round_up(pl.cdiv(M, 4), 8 * r)))
    # VMEM ceiling: double-buffered patch/output tiles + resident operands.
    fixed = 2 * (r * Kp) * (r * N) * ib + 2 * 8 * (r * N) * 4
    per_token = 2 * Kp * ib + 2 * N * ob
    fit = (int(0.6 * vmem_limit) - fixed) // per_token
    if fit > 0:
        tm = min(tm, fit)
    tm = max(8 * r, (tm // (8 * r)) * (8 * r))

    M_pad = _round_up(M, tm)
    grid_m = M_pad // tm

    # Single pad call (no-op / elided when no padding is needed).  XLA fuses it
    # with the im2col transpose copy in the common case.
    patches = jnp.pad(patches, ((0, M_pad - M), (0, Kp - K)))
    # Packed view of the same row-major buffer: r consecutive tokens per row.
    p_packed = patches.reshape(M_pad // r, r * Kp)

    w_mat = jnp.pad(w.reshape(C_out, K).T,
                    ((0, Kp - K), (0, 0))).astype(compute_dtype)   # (Kp, N)
    if r > 1:
        w_block = jnp.kron(jnp.eye(r, dtype=compute_dtype), w_mat)  # (r*Kp, r*N)
    else:
        w_block = w_mat

    bgb = jnp.stack([jnp.tile(b.astype(jnp.float32), r),
                     jnp.tile(gamma.astype(jnp.float32), r),
                     jnp.tile(beta.astype(jnp.float32), r)], axis=0)  # (3, r*N)

    kernel = functools.partial(conv_ln_kernel, n_true=N, pack_r=r)

    out_packed = pl.pallas_call(
        kernel,
        out_shape=jax.ShapeDtypeStruct((M_pad // r, r * N), out_dtype),
        grid_spec=pltpu.PrefetchScalarGridSpec(
            num_scalar_prefetch=0,
            grid=(grid_m,),
            in_specs=[
                pl.BlockSpec((tm // r, r * Kp), lambda i: (i, 0)),
                pl.BlockSpec(w_block.shape, lambda i: (0, 0)),
                pl.BlockSpec(bgb.shape, lambda i: (0, 0)),
            ],
            out_specs=pl.BlockSpec((tm // r, r * N), lambda i: (i, 0)),
        ),
        compiler_params=pltpu.CompilerParams(
            dimension_semantics=("parallel",),
            vmem_limit_bytes=vmem_limit,
        ),
    )(p_packed, w_block, bgb)

    # Packed output shares the row-major layout of (M_pad, N): unpack is free.
    out = out_packed.reshape(M_pad, N)[:M]
    return out.reshape(B, Ho * Wo, C_out)


def _reference(x, w, b, gamma, beta, kernel_size, stride):
    pad = (kernel_size - 1) // 2
    y = jax.lax.conv_general_dilated(
        x, w, window_strides=(stride, stride),
        padding=((pad, pad), (pad, pad)),
        dimension_numbers=("NCHW", "OIHW", "NCHW"),
    ) + b[None, :, None, None]
    B, C_out, Ho, Wo = y.shape
    y = y.reshape(B, C_out, Ho * Wo).transpose(0, 2, 1)
    mean = jnp.mean(y, axis=-1, keepdims=True)
    var = jnp.mean((y - mean) ** 2, axis=-1, keepdims=True)
    y_hat = (y - mean) * jax.lax.rsqrt(var + LN_EPS)
    return y_hat * gamma[None, None, :] + beta[None, None, :]


if __name__ == "__main__":
    # Small shapes consistent with the module.
    B, C_in, H, W = 2, 4, 16, 16
    C_out, k, stride = 32, 3, 2

    key = jax.random.PRNGKey(0)
    kx, kw, kb, kg, kbt = jax.random.split(key, 5)
    x = jax.random.normal(kx, (B, C_in, H, W), dtype=jnp.float32)
    w = jax.random.normal(kw, (C_out, C_in, k, k), dtype=jnp.float32) * 0.1
    b = jax.random.normal(kb, (C_out,), dtype=jnp.float32) * 0.1
    gamma = 1.0 + 0.1 * jax.random.normal(kg, (C_out,), dtype=jnp.float32)
    beta = 0.1 * jax.random.normal(kbt, (C_out,), dtype=jnp.float32)

    out = conv_token_embedding(x, w, b, gamma, beta,
                               kernel_size=k, stride=stride)
    out = jax.block_until_ready(out)

    Ho, Wo = H // stride, W // stride
    assert out.shape == (B, Ho * Wo, C_out), out.shape

    # Reference matched to the kernel's bf16 multiplies (f32 accumulation).
    xq = x.astype(jnp.bfloat16).astype(jnp.float32)
    wq = w.astype(jnp.bfloat16).astype(jnp.float32)
    ref_bf16 = _reference(xq, wq, b, gamma, beta, k, stride)
    # Full-precision reference (module semantics).
    ref_f32 = _reference(x, w, b, gamma, beta, k, stride)

    assert jnp.allclose(out, ref_bf16, atol=2e-2, rtol=2e-2), \
        float(jnp.max(jnp.abs(out - ref_bf16)))
    assert jnp.allclose(out, ref_f32, atol=5e-2, rtol=5e-2), \
        float(jnp.max(jnp.abs(out - ref_f32)))

    print("KERNEL_OK")
</pallas_src>

<mosaic_0001>
module attributes {stable_mosaic.version = 11 : i64} {
  func.func @conv_ln_kernel(%arg0: i32, %arg1: memref<8x144xbf16, #tpu.memory_space<vmem>>, %arg2: memref<144x128xbf16, #tpu.memory_space<vmem>>, %arg3: memref<3x128xf32, #tpu.memory_space<vmem>>, %arg4: memref<8x128xf32, #tpu.memory_space<vmem>>) attributes {dimension_semantics = [#tpu.dimension_semantics<parallel>], iteration_bounds = array<i64: 4>, scalar_prefetch = 0 : i64, scratch_operands = 0 : i64, tpu.core_type = #tpu.core_type<tc>, window_params = [{transform_indices = @transform_0, window_bounds = array<i64: 8, 144>}, {pipeline_mode = #tpu.pipeline_mode<synchronous>, transform_indices = @transform_1, window_bounds = array<i64: 144, 128>}, {pipeline_mode = #tpu.pipeline_mode<synchronous>, transform_indices = @transform_2, window_bounds = array<i64: 3, 128>}, {transform_indices = @transform_3, window_bounds = array<i64: 8, 128>}]} {
    %c0 = arith.constant 0 : index
    %c0_0 = arith.constant 0 : index
    %0 = vector.load %arg1[%c0, %c0_0] : memref<8x144xbf16, #tpu.memory_space<vmem>>, vector<8x144xbf16>
    %c0_1 = arith.constant 0 : index
    %c0_2 = arith.constant 0 : index
    %1 = vector.load %arg2[%c0_1, %c0_2] : memref<144x128xbf16, #tpu.memory_space<vmem>>, vector<144x128xbf16>
    %cst = arith.constant dense<0.000000e+00> : vector<8x128xf32>
    %2 = tpu.matmul %0, %1, %cst {dimension_numbers = #tpu.dot_dimension_numbers<[1], [0], [0], [1], [0, 0, 1, 1], [], []>} : vector<8x144xbf16>, vector<144x128xbf16>, vector<8x128xf32> -> vector<8x128xf32>
    %c0_3 = arith.constant 0 : index
    %c0_4 = arith.constant 0 : index
    %3 = vector.load %arg3[%c0_3, %c0_4] : memref<3x128xf32, #tpu.memory_space<vmem>>, vector<1x128xf32>
    %4 = vector.broadcast %3 : vector<1x128xf32> to vector<8x128xf32>
    %5 = arith.addf %2, %4 : vector<8x128xf32>
    %6 = tpu.iota {dimensions = array<i32: 1>} : vector<8x128xi32>
    %c127_i32 = arith.constant 127 : i32
    %7 = tpu.dynamic_rotate %5 by %c127_i32 dim 1 : vector<8x128xf32>, i32 -> vector<8x128xf32>
    %c1_i32 = arith.constant 1 : i32
    %8 = tpu.dynamic_rotate %5 by %c1_i32 dim 1 : vector<8x128xf32>, i32 -> vector<8x128xf32>
    %c1_i32_5 = arith.constant 1 : i32
    %9 = vector.broadcast %c1_i32_5 : i32 to vector<8x128xi32>
    %10 = arith.andi %6, %9 : vector<8x128xi32>
    %c0_i32 = arith.constant 0 : i32
    %11 = vector.broadcast %c0_i32 : i32 to vector<8x128xi32>
    %12 = arith.cmpi eq, %10, %11 : vector<8x128xi32>
    %13 = arith.select %12, %7, %8 : vector<8x128xi1>, vector<8x128xf32>
    %14 = arith.addf %5, %13 : vector<8x128xf32>
    %c126_i32 = arith.constant 126 : i32
    %15 = tpu.dynamic_rotate %14 by %c126_i32 dim 1 : vector<8x128xf32>, i32 -> vector<8x128xf32>
    %c2_i32 = arith.constant 2 : i32
    %16 = tpu.dynamic_rotate %14 by %c2_i32 dim 1 : vector<8x128xf32>, i32 -> vector<8x128xf32>
    %c2_i32_6 = arith.constant 2 : i32
    %17 = vector.broadcast %c2_i32_6 : i32 to vector<8x128xi32>
    %18 = arith.andi %6, %17 : vector<8x128xi32>
    %c0_i32_7 = arith.constant 0 : i32
    %19 = vector.broadcast %c0_i32_7 : i32 to vector<8x128xi32>
    %20 = arith.cmpi eq, %18, %19 : vector<8x128xi32>
    %21 = arith.select %20, %15, %16 : vector<8x128xi1>, vector<8x128xf32>
    %22 = arith.addf %14, %21 : vector<8x128xf32>
    %c124_i32 = arith.constant 124 : i32
    %23 = tpu.dynamic_rotate %22 by %c124_i32 dim 1 : vector<8x128xf32>, i32 -> vector<8x128xf32>
    %c4_i32 = arith.constant 4 : i32
    %24 = tpu.dynamic_rotate %22 by %c4_i32 dim 1 : vector<8x128xf32>, i32 -> vector<8x128xf32>
    %c4_i32_8 = arith.constant 4 : i32
    %25 = vector.broadcast %c4_i32_8 : i32 to vector<8x128xi32>
    %26 = arith.andi %6, %25 : vector<8x128xi32>
    %c0_i32_9 = arith.constant 0 : i32
    %27 = vector.broadcast %c0_i32_9 : i32 to vector<8x128xi32>
    %28 = arith.cmpi eq, %26, %27 : vector<8x128xi32>
    %29 = arith.select %28, %23, %24 : vector<8x128xi1>, vector<8x128xf32>
    %30 = arith.addf %22, %29 : vector<8x128xf32>
    %c120_i32 = arith.constant 120 : i32
    %31 = tpu.dynamic_rotate %30 by %c120_i32 dim 1 : vector<8x128xf32>, i32 -> vector<8x128xf32>
    %c8_i32 = arith.constant 8 : i32
    %32 = tpu.dynamic_rotate %30 by %c8_i32 dim 1 : vector<8x128xf32>, i32 -> vector<8x128xf32>
    %c8_i32_10 = arith.constant 8 : i32
    %33 = vector.broadcast %c8_i32_10 : i32 to vector<8x128xi32>
    %34 = arith.andi %6, %33 : vector<8x128xi32>
    %c0_i32_11 = arith.constant 0 : i32
    %35 = vector.broadcast %c0_i32_11 : i32 to vector<8x128xi32>
    %36 = arith.cmpi eq, %34, %35 : vector<8x128xi32>
    %37 = arith.select %36, %31, %32 : vector<8x128xi1>, vector<8x128xf32>
    %38 = arith.addf %30, %37 : vector<8x128xf32>
    %c112_i32 = arith.constant 112 : i32
    %39 = tpu.dynamic_rotate %38 by %c112_i32 dim 1 : vector<8x128xf32>, i32 -> vector<8x128xf32>
    %c16_i32 = arith.constant 16 : i32
    %40 = tpu.dynamic_rotate %38 by %c16_i32 dim 1 : vector<8x128xf32>, i32 -> vector<8x128xf32>
    %c16_i32_12 = arith.constant 16 : i32
    %41 = vector.broadcast %c16_i32_12 : i32 to vector<8x128xi32>
    %42 = arith.andi %6, %41 : vector<8x128xi32>
    %c0_i32_13 = arith.constant 0 : i32
    %43 = vector.broadcast %c0_i32_13 : i32 to vector<8x128xi32>
    %44 = arith.cmpi eq, %42, %43 : vector<8x128xi32>
    %45 = arith.select %44, %39, %40 : vector<8x128xi1>, vector<8x128xf32>
    %46 = arith.addf %38, %45 : vector<8x128xf32>
    %cst_14 = arith.constant 3.125000e-02 : f32
    %47 = vector.broadcast %cst_14 : f32 to vector<8x128xf32>
    %48 = arith.mulf %46, %47 : vector<8x128xf32>
    %49 = arith.subf %5, %48 : vector<8x128xf32>
    %50 = arith.mulf %49, %49 : vector<8x128xf32>
    %c127_i32_15 = arith.constant 127 : i32
    %51 = tpu.dynamic_rotate %50 by %c127_i32_15 dim 1 : vector<8x128xf32>, i32 -> vector<8x128xf32>
    %c1_i32_16 = arith.constant 1 : i32
    %52 = tpu.dynamic_rotate %50 by %c1_i32_16 dim 1 : vector<8x128xf32>, i32 -> vector<8x128xf32>
    %c1_i32_17 = arith.constant 1 : i32
    %53 = vector.broadcast %c1_i32_17 : i32 to vector<8x128xi32>
    %54 = arith.andi %6, %53 : vector<8x128xi32>
    %c0_i32_18 = arith.constant 0 : i32
    %55 = vector.broadcast %c0_i32_18 : i32 to vector<8x128xi32>
    %56 = arith.cmpi eq, %54, %55 : vector<8x128xi32>
    %57 = arith.select %56, %51, %52 : vector<8x128xi1>, vector<8x128xf32>
    %58 = arith.addf %50, %57 : vector<8x128xf32>
    %c126_i32_19 = arith.constant 126 : i32
    %59 = tpu.dynamic_rotate %58 by %c126_i32_19 dim 1 : vector<8x128xf32>, i32 -> vector<8x128xf32>
    %c2_i32_20 = arith.constant 2 : i32
    %60 = tpu.dynamic_rotate %58 by %c2_i32_20 dim 1 : vector<8x128xf32>, i32 -> vector<8x128xf32>
    %c2_i32_21 = arith.constant 2 : i32
    %61 = vector.broadcast %c2_i32_21 : i32 to vector<8x128xi32>
    %62 = arith.andi %6, %61 : vector<8x128xi32>
    %c0_i32_22 = arith.constant 0 : i32
    %63 = vector.broadcast %c0_i32_22 : i32 to vector<8x128xi32>
    %64 = arith.cmpi eq, %62, %63 : vector<8x128xi32>
    %65 = arith.select %64, %59, %60 : vector<8x128xi1>, vector<8x128xf32>
    %66 = arith.addf %58, %65 : vector<8x128xf32>
    %c124_i32_23 = arith.constant 124 : i32
    %67 = tpu.dynamic_rotate %66 by %c124_i32_23 dim 1 : vector<8x128xf32>, i32 -> vector<8x128xf32>
    %c4_i32_24 = arith.constant 4 : i32
    %68 = tpu.dynamic_rotate %66 by %c4_i32_24 dim 1 : vector<8x128xf32>, i32 -> vector<8x128xf32>
    %c4_i32_25 = arith.constant 4 : i32
    %69 = vector.broadcast %c4_i32_25 : i32 to vector<8x128xi32>
    %70 = arith.andi %6, %69 : vector<8x128xi32>
    %c0_i32_26 = arith.constant 0 : i32
    %71 = vector.broadcast %c0_i32_26 : i32 to vector<8x128xi32>
    %72 = arith.cmpi eq, %70, %71 : vector<8x128xi32>
    %73 = arith.select %72, %67, %68 : vector<8x128xi1>, vector<8x128xf32>
    %74 = arith.addf %66, %73 : vector<8x128xf32>
    %c120_i32_27 = arith.constant 120 : i32
    %75 = tpu.dynamic_rotate %74 by %c120_i32_27 dim 1 : vector<8x128xf32>, i32 -> vector<8x128xf32>
    %c8_i32_28 = arith.constant 8 : i32
    %76 = tpu.dynamic_rotate %74 by %c8_i32_28 dim 1 : vector<8x128xf32>, i32 -> vector<8x128xf32>
    %c8_i32_29 = arith.constant 8 : i32
    %77 = vector.broadcast %c8_i32_29 : i32 to vector<8x128xi32>
    %78 = arith.andi %6, %77 : vector<8x128xi32>
    %c0_i32_30 = arith.constant 0 : i32
    %79 = vector.broadcast %c0_i32_30 : i32 to vector<8x128xi32>
    %80 = arith.cmpi eq, %78, %79 : vector<8x128xi32>
    %81 = arith.select %80, %75, %76 : vector<8x128xi1>, vector<8x128xf32>
    %82 = arith.addf %74, %81 : vector<8x128xf32>
    %c112_i32_31 = arith.constant 112 : i32
    %83 = tpu.dynamic_rotate %82 by %c112_i32_31 dim 1 : vector<8x128xf32>, i32 -> vector<8x128xf32>
    %c16_i32_32 = arith.constant 16 : i32
    %84 = tpu.dynamic_rotate %82 by %c16_i32_32 dim 1 : vector<8x128xf32>, i32 -> vector<8x128xf32>
    %c16_i32_33 = arith.constant 16 : i32
    %85 = vector.broadcast %c16_i32_33 : i32 to vector<8x128xi32>
    %86 = arith.andi %6, %85 : vector<8x128xi32>
    %c0_i32_34 = arith.constant 0 : i32
    %87 = vector.broadcast %c0_i32_34 : i32 to vector<8x128xi32>
    %88 = arith.cmpi eq, %86, %87 : vector<8x128xi32>
    %89 = arith.select %88, %83, %84 : vector<8x128xi1>, vector<8x128xf32>
    %90 = arith.addf %82, %89 : vector<8x128xf32>
    %cst_35 = arith.constant 3.125000e-02 : f32
    %91 = vector.broadcast %cst_35 : f32 to vector<8x128xf32>
    %92 = arith.mulf %90, %91 : vector<8x128xf32>
    %cst_36 = arith.constant 9.99999974E-6 : f32
    %93 = vector.broadcast %cst_36 : f32 to vector<8x128xf32>
    %94 = arith.addf %92, %93 : vector<8x128xf32>
    %95 = math.rsqrt %94 : vector<8x128xf32>
    %96 = arith.mulf %49, %95 : vector<8x128xf32>
    %c1 = arith.constant 1 : index
    %c0_37 = arith.constant 0 : index
    %97 = vector.load %arg3[%c1, %c0_37] : memref<3x128xf32, #tpu.memory_space<vmem>>, vector<1x128xf32>
    %98 = vector.broadcast %97 : vector<1x128xf32> to vector<8x128xf32>
    %99 = arith.mulf %96, %98 : vector<8x128xf32>
    %c2 = arith.constant 2 : index
    %c0_38 = arith.constant 0 : index
    %100 = vector.load %arg3[%c2, %c0_38] : memref<3x128xf32, #tpu.memory_space<vmem>>, vector<1x128xf32>
    %101 = vector.broadcast %100 : vector<1x128xf32> to vector<8x128xf32>
    %102 = arith.addf %99, %101 : vector<8x128xf32>
    %c0_39 = arith.constant 0 : index
    %c0_40 = arith.constant 0 : index
    %103 = vector.load %arg4[%c0_39, %c0_40] : memref<8x128xf32, #tpu.memory_space<vmem>>, vector<8x128xf32>
    tpu.vector_store %arg4[%c0_39, %c0_40], %102 {strides = array<i32>} : memref<8x128xf32, #tpu.memory_space<vmem>>, vector<8x128xf32>,
    return
  }
  func.func @transform_0(%arg0: i32) -> (i32, i32) {
    %c0_i32 = arith.constant 0 : i32
    %c0_i32_0 = arith.constant 0 : i32
    return %arg0, %c0_i32 : i32, i32
  }
  func.func @transform_1(%arg0: i32) -> (i32, i32) {
    %c0_i32 = arith.constant 0 : i32
    %c0_i32_0 = arith.constant 0 : i32
    %c0_i32_1 = arith.constant 0 : i32
    return %c0_i32, %c0_i32_0 : i32, i32
  }
  func.func @transform_2(%arg0: i32) -> (i32, i32) {
    %c0_i32 = arith.constant 0 : i32
    %c0_i32_0 = arith.constant 0 : i32
    %c0_i32_1 = arith.constant 0 : i32
    return %c0_i32, %c0_i32_0 : i32, i32
  }
  func.func @transform_3(%arg0: i32) -> (i32, i32) {
    %c0_i32 = arith.constant 0 : i32
    %c0_i32_0 = arith.constant 0 : i32
    return %arg0, %c0_i32 : i32, i32
  }
}

</mosaic_0001>

<llo_original>
// kernel: tile.18
$region0: #{tile.18}
  #allocation0 [shape = 's32[1]{0}', space=sflag, size = 0x4, scoped, tag = 'scoped memory for tile.18']
  %s0 = inlined_call_operand.vmem [shape: f32[32], index: 0, kind: input, shape index: {}]
  %s1 = inlined_call_operand.vmem [shape: f32[4,32], index: 1, kind: output, shape index: {}]
  // Predicated region
  $region2: #{tile.18} parent=0 // pred_check
    _
  $region3: #{tile.18} parent=0 // pred_check_branch
    %3 = sbr.rel (0) target = $region5
  $region4: #{tile.18} parent=0 // pred_region
    _
  $region5: #{tile.18} parent=0 // pred_fallthru
    _
  %v4 = vld [vmem:[%s0] ss:$0 sm:$0xff]
  %5 = vst [vmem:[%s1] sm:$0xf] %v4

// kernel: tile.27
$region0: #{tile.27}
  %s0 = inlined_call_operand.vmem [shape: f32[4,32], index: 0, kind: input, shape index: {}]
  %s1 = inlined_call_operand.vmem [shape: f32[1,128], index: 1, kind: output, shape index: {}]
  $region1: #{tile.27} parent=0
    #allocation0 [shape = 'u8[4096]{0}', space=vmem, size = 0x1000, scoped, tag = 'scoped mem for output reshape']
    #allocation1 [shape = 'u8[4096]{0}', space=vmem, size = 0x1000, scoped, tag = 'scoped mem for input reshape']
    %s3 = sshllo.u32 0, 4
    %v4 = vld [vmem:[%s0] sm:%s3]
    %5 = vst [vmem:[#allocation1] sm:%s3] %v4
    %v6 = vld [vmem:[#allocation1] sm:$0x1]
    %vm7 = vcmask 261120
    %8 = vst.msk [vmem:[#allocation0] sm:$0x1] %vm7, %v6
    %s9 = scalar_lea.vmem [#allocation1], 3
    %v10 = vld [vmem:[%s9] sm:$0x1]
    %11 = vrot.lane.b32.xlu0 %v10, 96
    %v12 = vpop.permute.xlu0 %11
    %vm13 = vcmask 1048320
    %14 = vst.msk [vmem:[#allocation0] sm:$0x1] %vm13, %v12
    %s15 = scalar_lea.vmem [#allocation1], 2
    %v16 = vld [vmem:[%s15] sm:$0x1]
    %17 = vrot.lane.b32.xlu0 %v16, 64
    %v18 = vpop.permute.xlu0 %17
    %vm19 = vcmask 785920
    %20 = vst.msk [vmem:[#allocation0] sm:$0x1] %vm19, %v18
    %s21 = scalar_lea.vmem [#allocation1], 1
    %v22 = vld [vmem:[%s21] sm:$0x1]
    %23 = vrot.lane.b32.xlu0 %v22, 32
    %v24 = vpop.permute.xlu0 %23
    %vm25 = vcmask 523520
    %26 = vst.msk [vmem:[#allocation0] sm:$0x1] %vm25, %v24
    %s28 = sshllo.u32 0, 1
    %v30 = vld [vmem:[#allocation0] sm:%s28]
    %s31 = sshllo.u32 0, 1
    %32 = vst [vmem:[%s1] sm:%s31] %v30

// kernel: conv_token_embedding.1
$region0: #{conv_token_embedding.1}
  #allocation0 [shape = 'u32[]', space=smem, size = 0x4, offset = 0x4, fixed_abs, tag = 'smem constant byte address 0x4 - core index']
  #allocation1 [shape = 'u32[144,128]{1,0:T(1,128)}', space=vmem, size = 0x12000, scoped, tag = 'internal scratch']
  %s0 = inlined_call_operand.vmem [shape: bf16[32,144], index: 0, kind: input, shape index: {}]
  %s1 = inlined_call_operand.vmem [shape: bf16[144,128], index: 1, kind: input, shape index: {}]
  %s2 = inlined_call_operand.vmem [shape: f32[3,128], index: 2, kind: input, shape index: {}]
  %s3 = inlined_call_operand.vmem [shape: f32[32,128], index: 3, kind: output, shape index: {}]
  %s4 = sld [smem:[#allocation0]]
  $region45: #{conv_token_embedding.1} parent=0
    _
  %s6 = ssub.s32 1, %s4
  %s7 = scalar_select 0, %s6, %s4
  loop: start=0, step=1, limit=6
  $region2: #{conv_token_embedding.1} parent=0 // loop_pre_header
    _
  $region3: #{conv_token_embedding.1} parent=0 // loop_header
    %s9 = sphi 0, %s13
    %p10 = scmp.ge.s32.totalorder %s9, 6
    %s19 = sphi 0, %s21
    %s22 = sphi 0, %s19
    %s23 = sphi 0, %s22
    %s39 = sphi 0, %s23
    %s43 = sphi 0, %s43
    %s45 = sphi 0, %s43
    %s46 = sphi 0, %s45
    %s60 = sphi 0, %s46
    %s64 = sphi 0, %s64
    %s66 = sphi 0, %s64
    %s67 = sphi 0, %s66
    %s81 = sphi 0, %s67
    %s87 = sphi 0, %s89
    %s90 = sphi 0, %s87
    %s91 = sphi 0, %s90
    %s107 = sphi 0, %s91
  $region4: #{conv_token_embedding.1} parent=0 // loop_header_branch
    %12 = sbr.rel (%p10) target = $region8
  $region5: #{conv_token_embedding.1} parent=0 // loop_body
    %s14 = ssub.s32 %s9, 1
    %s15 = ssub.s32 %s9, 2
    %s16 = sadd.s32 %s9, 1
    %s17 = ssub.s32 %s9, %s16
    %p18 = scmp.eq.s32.totalorder %s17, 0
    %s20 = sadd.s32 %s19, 1
    %s21 = scalar_select %p18, %s19, %s20
    %p24 = pneg %p18
    %p25 = scmp.eq.s32.totalorder %s9, 3
    %p26 = por %p24, %p25
    %p27 = scmp.ne.s32.totalorder %s19, %s22
    %p28 = scmp.eq.s32.totalorder %s9, 0
    %p29 = por %p27, %p28
    %p30 = scmp.ne.s32.totalorder %s19, %s22
    %p31 = scmp.eq.s32.totalorder %s14, 3
    %p32 = por %p30, %p31
    %p33 = scmp.ne.s32.totalorder %s22, %s23
    %p34 = scmp.eq.s32.totalorder %s14, 0
    %p35 = por %p33, %p34
    %p36 = scmp.ne.s32.totalorder %s22, %s23
    %p37 = scmp.eq.s32.totalorder %s15, 3
    %p38 = por %p36, %p37
    %p40 = scmp.ne.s32.totalorder %s23, %s39
    %p41 = scmp.eq.s32.totalorder %s15, 0
    %p42 = por %p40, %p41
    %s44 = sadd.s32 %s43, 1
    %p47 = scmp.eq.s32.totalorder %s9, 3
    %p48 = scmp.ne.s32.totalorder %s43, %s45
    %p49 = scmp.eq.s32.totalorder %s9, 0
    %p50 = por %p48, %p49
    %p51 = scmp.ne.s32.totalorder %s43, %s45
    %p52 = scmp.eq.s32.totalorder %s14, 3
    %p53 = por %p51, %p52
    %p54 = scmp.ne.s32.totalorder %s45, %s46
    %p55 = scmp.eq.s32.totalorder %s14, 0
    %p56 = por %p54, %p55
    %p57 = scmp.ne.s32.totalorder %s45, %s46
    %p58 = scmp.eq.s32.totalorder %s15, 3
    %p59 = por %p57, %p58
    %p61 = scmp.ne.s32.totalorder %s46, %s60
    %p62 = scmp.eq.s32.totalorder %s15, 0
    %p63 = por %p61, %p62
    %s65 = sadd.s32 %s64, 1
    %p68 = scmp.eq.s32.totalorder %s9, 3
    %p69 = scmp.ne.s32.totalorder %s64, %s66
    %p70 = scmp.eq.s32.totalorder %s9, 0
    %p71 = por %p69, %p70
    %p72 = scmp.ne.s32.totalorder %s64, %s66
    %p73 = scmp.eq.s32.totalorder %s14, 3
    %p74 = por %p72, %p73
    %p75 = scmp.ne.s32.totalorder %s66, %s67
    %p76 = scmp.eq.s32.totalorder %s14, 0
    %p77 = por %p75, %p76
    %p78 = scmp.ne.s32.totalorder %s66, %s67
    %p79 = scmp.eq.s32.totalorder %s15, 3
    %p80 = por %p78, %p79
    %p82 = scmp.ne.s32.totalorder %s67, %s81
    %p83 = scmp.eq.s32.totalorder %s15, 0
    %p84 = por %p82, %p83
    %s85 = ssub.s32 %s9, %s16
    %p86 = scmp.eq.s32.totalorder %s85, 0
    %s88 = sadd.s32 %s87, 1
    %s89 = scalar_select %p86, %s87, %s88
    %p92 = pneg %p86
    %p93 = scmp.eq.s32.totalorder %s9, 3
    %p94 = por %p92, %p93
    %p95 = scmp.ne.s32.totalorder %s87, %s90
    %p96 = scmp.eq.s32.totalorder %s9, 0
    %p97 = por %p95, %p96
    %p98 = scmp.ne.s32.totalorder %s87, %s90
    %p99 = scmp.eq.s32.totalorder %s14, 3
    %p100 = por %p98, %p99
    %p101 = scmp.ne.s32.totalorder %s90, %s91
    %p102 = scmp.eq.s32.totalorder %s14, 0
    %p103 = por %p101, %p102
    %p104 = scmp.ne.s32.totalorder %s90, %s91
    %p105 = scmp.eq.s32.totalorder %s15, 3
    %p106 = por %p104, %p105
    %p108 = scmp.ne.s32.totalorder %s91, %s107
    %p109 = scmp.eq.s32.totalorder %s15, 0
    %p110 = por %p108, %p109
    %p111 = scmp.le.s32.totalorder 1, %s9
    %p112 = scmp.lt.s32.totalorder %s9, 5
    %p113 = pnand %p111, %p112
    %p114 = pneg %p113
    // Predicated region
    $region9: #{conv_token_embedding.1} parent=5 // pred_check
      _
    $region10: #{conv_token_embedding.1} parent=5 // pred_check_branch
      %116 = sbr.rel (%p113) target = $region12
    $region11: #{conv_token_embedding.1} parent=5 // pred_region
      %s117 = ssub.s32 %s9, 1
      // Predicated region
      $region13: #{conv_token_embedding.1} parent=11 // pred_check
        %p118 = pneg %p56
      $region14: #{conv_token_embedding.1} parent=11 // pred_check_branch
        %120 = sbr.rel (%p118) target = $region16
      $region15: #{conv_token_embedding.1} parent=11 // pred_region
        _
      $region16: #{conv_token_embedding.1} parent=11 // pred_fallthru
        _
      // Predicated region
      $region17: #{conv_token_embedding.1} parent=11 // pred_check
        %p121 = pneg %p77
      $region18: #{conv_token_embedding.1} parent=11 // pred_check_branch
        %123 = sbr.rel (%p121) target = $region20
      $region19: #{conv_token_embedding.1} parent=11 // pred_region
        _
      $region20: #{conv_token_embedding.1} parent=11 // pred_fallthru
        _
    $region12: #{conv_token_embedding.1} parent=5 // pred_fallthru
      _
    %p124 = scmp.lt.s32.totalorder %s9, 4
    // Predicated region
    $region21: #{conv_token_embedding.1} parent=5 // pred_check
      %p125 = pneg %p124
    $region22: #{conv_token_embedding.1} parent=5 // pred_check_branch
      %127 = sbr.rel (%p125) target = $region24
    $region23: #{conv_token_embedding.1} parent=5 // pred_region
      // Predicated region
      $region25: #{conv_token_embedding.1} parent=23 // pred_check
        %p128 = pneg %p29
      $region26: #{conv_token_embedding.1} parent=23 // pred_check_branch
        %130 = sbr.rel (%p128) target = $region28
      $region27: #{conv_token_embedding.1} parent=23 // pred_region
        %p131 = scmp.lt.s32.totalorder %s9, 3
        %s132 = scalar_select %p131, %s9, 3
        %s133 = smul.addr %s132, 2
        %s134 = smul.addr %s133, 4
        %s135 = scalar_lea.vmem %s0, %s134
      $region28: #{conv_token_embedding.1} parent=23 // pred_fallthru
        _
    $region24: #{conv_token_embedding.1} parent=5 // pred_fallthru
      _
    %p136 = scmp.le.s32.totalorder 1, %s9
    %p137 = scmp.lt.s32.totalorder %s9, 5
    %p138 = pnand %p136, %p137
    %p139 = pneg %p138
    // Predicated region
    $region29: #{conv_token_embedding.1} parent=5 // pred_check
      _
    $region30: #{conv_token_embedding.1} parent=5 // pred_check_branch
      %141 = sbr.rel (%p138) target = $region32
    $region31: #{conv_token_embedding.1} parent=5 // pred_region
      %s142 = ssub.s32 %s9, 1
      %p143 = scmp.lt.s32.totalorder %s14, 3
      %s144 = scalar_select %p143, %s14, 3
      %s145 = smul.addr %s144, 2
      %s146 = smul.addr %s145, 4
      %s147 = scalar_lea.vmem %s0, %s146
      %p148 = pneg %p35
      %p149 = pneg %p32
      %p150 = pneg %p56
      %p151 = pneg %p53
      %p152 = pneg %p77
      %p153 = pneg %p74
      %p154 = pneg %p103
      %p155 = pneg %p100
      %p156 = scmp.lt.s32.totalorder %s14, 3
      %s157 = scalar_select %p156, %s14, 3
      %s158 = smul.addr %s157, 8
      %s159 = scalar_lea.vmem %s3, %s158
      %p160 = scmp.lt.s32.totalorder %s14, 3
      %s161 = scalar_select %p160, %s14, 3
      %s162 = smul.addr %s161, 2
      %s163 = smul.addr %s162, 4
      %s164 = scalar_lea.vmem %s0, %s163
      %p165 = scmp.lt.s32.totalorder %s14, 3
      %s166 = scalar_select %p165, %s14, 3
      %s167 = smul.addr %s166, 8
      %s168 = scalar_lea.vmem %s3, %s167
      %v170 = vld [vmem:[%s164] sm:$0xff]
      %v171 = vld [vmem:[%s1] sm:$0xf]
      %v172 = vld [vmem:[%s1 + $0x4] sm:$0xf]
      %v173 = vld [vmem:[%s1 + $0x8] sm:$0xf]
      %v174 = vld [vmem:[%s1 + $0xc] sm:$0xf]
      %v175 = vld [vmem:[%s1 + $0x10] sm:$0xf]
      %v176 = vld [vmem:[%s1 + $0x14] sm:$0xf]
      %v177 = vld [vmem:[%s1 + $0x18] sm:$0xf]
      %v178 = vld [vmem:[%s1 + $0x1c] sm:$0xf]
      %v179 = vld [vmem:[%s1 + $0x20] sm:$0xf]
      %v180 = vld [vmem:[%s1 + $0x24] sm:$0xf]
      %v181 = vld [vmem:[%s1 + $0x28] sm:$0xf]
      %v182 = vld [vmem:[%s1 + $0x2c] sm:$0xf]
      %v183 = vld [vmem:[%s1 + $0x30] sm:$0xf]
      %v184 = vld [vmem:[%s1 + $0x34] sm:$0xf]
      %v185 = vld [vmem:[%s1 + $0x38] sm:$0xf]
      %v186 = vld [vmem:[%s1 + $0x3c] sm:$0xf]
      %v187 = vld [vmem:[%s1 + $0x40] sm:$0xf]
      %v188 = vld [vmem:[%s1 + $0x44] sm:$0xf]
      %v189 = vld [vmem:[%s2] sm:$0x1]
      %v190 = vlaneseq
      %v191 = vshrl.u32 %v190, 7
      %v192 = vsub.s32 0, %v191
      %v193 = vrot.slane %v189, %v192
      %v195 = vunpack.c.l.b16 %v170
      %v196 = vunpack.c.h.b16 %v170
      %v197 = vpack.c.b16 %v195, %v195
      %v198 = vpack.c.b16 %v196, %v196
      %v218 = vunpack.c.l.b16 %v171
      %v219 = vunpack.c.l.b16 %v172
      %v220 = vunpack.c.l.b16 %v173
      %v221 = vunpack.c.l.b16 %v174
      %v222 = vunpack.c.l.b16 %v175
      %v223 = vunpack.c.l.b16 %v176
      %v224 = vunpack.c.l.b16 %v177
      %v225 = vunpack.c.l.b16 %v178
      %v226 = vunpack.c.l.b16 %v179
      %v227 = vunpack.c.l.b16 %v180
      %v228 = vunpack.c.l.b16 %v181
      %v229 = vunpack.c.l.b16 %v182
      %v230 = vunpack.c.l.b16 %v183
      %v231 = vunpack.c.l.b16 %v184
      %v232 = vunpack.c.l.b16 %v185
      %v233 = vunpack.c.l.b16 %v186
      %v234 = vunpack.c.l.b16 %v187
      %v235 = vunpack.c.l.b16 %v188
      %v236 = vpack.c.b16 %v219, %v218
      %v237 = vpack.c.b16 %v221, %v220
      %v238 = vpack.c.b16 %v223, %v222
      %v239 = vpack.c.b16 %v225, %v224
      %v240 = vpack.c.b16 %v227, %v226
      %v241 = vpack.c.b16 %v229, %v228
      %v242 = vpack.c.b16 %v231, %v230
      %v243 = vpack.c.b16 %v233, %v232
      %v244 = vpack.c.b16 %v235, %v234
      %vm254 = vcmask 130048
      %v256 = vsel %vm254, %v198, 0
      %258 = vmatprep.subr.bf16.mxu0 0
      %259 = vmatpush1.bf16.msra.mxu0 %v236
      %260 = vmatprep.subr.bf16.mxu0 0
      %261 = vmatpush1.bf16.msra.mxu0 %v237
      %262 = vmatprep.subr.bf16.mxu0 0
      %263 = vmatpush1.bf16.msra.mxu0 %v238
      %264 = vmatprep.subr.bf16.mxu0 0
      %265 = vmatpush1.bf16.msra.mxu0 %v239
      %266 = vmatprep.subr.bf16.mxu0 0
      %267 = vmatpush1.bf16.msra.mxu0 %v240
      %268 = vmatprep.subr.bf16.mxu0 0
      %269 = vmatpush1.bf16.msra.mxu0 %v241
      %270 = vmatprep.subr.bf16.mxu0 0
      %271 = vmatpush1.bf16.msra.mxu0 %v242
      %272 = vmatprep.subr.bf16.mxu0 0
      %273 = vmatpush1.bf16.msra.mxu0 %v243
      %274 = vmatprep.subr.bf16.mxu0 0
      %275 = vmatpush1.bf16.msra.mxu0 %v244
      %276 = vmatprep.subr.bf16.mxu0 0
      %277 = vmatpush1.bf16.msra.mxu0 0
      %278 = vmatprep.subr.bf16.mxu0 0
      %279 = vmatpush1.bf16.msra.mxu0 0
      %280 = vmatprep.subr.bf16.mxu0 0
      %281 = vmatpush1.bf16.msra.mxu0 0
      %282 = vmatprep.subr.bf16.mxu0 0
      %283 = vmatpush1.bf16.msra.mxu0 0
      %284 = vmatprep.subr.bf16.mxu0 0
      %285 = vmatpush1.bf16.msra.mxu0 0
      %286 = vmatprep.subr.bf16.mxu0 0
      %287 = vmatpush1.bf16.msra.mxu0 0
      %288 = vmatprep.subr.bf16.mxu0 0
      %289 = vmatpush1.bf16.msra.mxu0 0
      %290 = vmatprep.mubr.bf16.mxu0 %v256
      %291 = vmatmul.mubr.bf16.gmra.mrb[0].mxu0 %v197
      %v292 = vpop.f32.mrb[0].mxu0
      %v293 = vadd.f32 %v193, %v292
      %v294 = vpop.f32.mrb[0].mxu0
      %v295 = vpop.f32.mrb[0].mxu0
      %v296 = vpop.f32.mrb[0].mxu0
      %297 = vdwg.mxu0
      %v298 = vlaneseq
      %v299 = vand.u32 %v298, 127
      %300 = vrot.lane.b32.xlu0 %v293, 127
      %v301 = vpop.permute.xlu0 %300
      %302 = vrot.lane.b32.xlu0 %v293, 1
      %v303 = vpop.permute.xlu0 %302
      %v304 = vand.u32 %v299, 1
      %vm305 = vcmp.eq.s32.totalorder %v304, 0
      %v306 = vsel %vm305, %v301, %v303
      %v307 = vadd.f32 %v293, %v306
      %308 = vrot.lane.b32.xlu0 %v307, 126
      %v309 = vpop.permute.xlu0 %308
      %310 = vrot.lane.b32.xlu0 %v307, 2
      %v311 = vpop.permute.xlu0 %310
      %v312 = vand.u32 %v299, 2
      %vm313 = vcmp.eq.s32.totalorder %v312, 0
      %v314 = vsel %vm313, %v309, %v311
      %v315 = vadd.f32 %v307, %v314
      %316 = vrot.lane.b32.xlu0 %v315, 124
      %v317 = vpop.permute.xlu0 %316
      %318 = vrot.lane.b32.xlu0 %v315, 4
      %v319 = vpop.permute.xlu0 %318
      %v320 = vand.u32 %v299, 4
      %vm321 = vcmp.eq.s32.totalorder %v320, 0
      %v322 = vsel %vm321, %v317, %v319
      %v323 = vadd.f32 %v315, %v322
      %324 = vrot.lane.b32.xlu0 %v323, 120
      %v325 = vpop.permute.xlu0 %324
      %326 = vrot.lane.b32.xlu0 %v323, 8
      %v327 = vpop.permute.xlu0 %326
      %v328 = vand.u32 %v299, 8
      %vm329 = vcmp.eq.s32.totalorder %v328, 0
      %v330 = vsel %vm329, %v325, %v327
      %v331 = vadd.f32 %v323, %v330
      %332 = vrot.lane.b32.xlu0 %v331, 112
      %v333 = vpop.permute.xlu0 %332
      %334 = vrot.lane.b32.xlu0 %v331, 16
      %v335 = vpop.permute.xlu0 %334
      %v336 = vand.u32 %v299, 16
      %vm337 = vcmp.eq.s32.totalorder %v336, 0
      %v338 = vsel %vm337, %v333, %v335
      %v339 = vadd.f32 %v331, %v338
      %v340 = vmul.f32 %v339, 0.03125
      %v341 = vsub.f32 %v293, %v340
      %v342 = vmul.f32 %v341, %v341
      %343 = vrot.lane.b32.xlu0 %v342, 127
      %v344 = vpop.permute.xlu0 %343
      %345 = vrot.lane.b32.xlu0 %v342, 1
      %v346 = vpop.permute.xlu0 %345
      %v347 = vsel %vm305, %v344, %v346
      %v348 = vadd.f32 %v342, %v347
      %349 = vrot.lane.b32.xlu0 %v348, 126
      %v350 = vpop.permute.xlu0 %349
      %351 = vrot.lane.b32.xlu0 %v348, 2
      %v352 = vpop.permute.xlu0 %351
      %v353 = vsel %vm313, %v350, %v352
      %v354 = vadd.f32 %v348, %v353
      %355 = vrot.lane.b32.xlu0 %v354, 124
      %v356 = vpop.permute.xlu0 %355
      %357 = vrot.lane.b32.xlu0 %v354, 4
      %v358 = vpop.permute.xlu0 %357
      %v359 = vsel %vm321, %v356, %v358
      %v360 = vadd.f32 %v354, %v359
      %361 = vrot.lane.b32.xlu0 %v360, 120
      %v362 = vpop.permute.xlu0 %361
      %363 = vrot.lane.b32.xlu0 %v360, 8
      %v364 = vpop.permute.xlu0 %363
      %v365 = vsel %vm329, %v362, %v364
      %v366 = vadd.f32 %v360, %v365
      %367 = vrot.lane.b32.xlu0 %v366, 112
      %v368 = vpop.permute.xlu0 %367
      %369 = vrot.lane.b32.xlu0 %v366, 16
      %v370 = vpop.permute.xlu0 %369
      %v371 = vsel %vm337, %v368, %v370
      %v372 = vadd.f32 %v366, %v371
      %v373 = vmul.f32 %v372, 0.03125
      %v374 = vadd.f32 %v373, 1e-05
      %v375 = vrsqrt.pop %v374
      %v376 = vmul.f32 %v341, %v375
      %v377 = vld [vmem:[%s2 + $0x1] sm:$0x1]
      %v378 = vlaneseq
      %v379 = vshrl.u32 %v378, 7
      %v380 = vsub.s32 0, %v379
      %v381 = vrot.slane %v377, %v380
      %v382 = vmul.f32 %v376, %v381
      %v383 = vld [vmem:[%s2 + $0x2] sm:$0x1]
      %v384 = vlaneseq
      %v385 = vshrl.u32 %v384, 7
      %v386 = vsub.s32 0, %v385
      %v387 = vrot.slane %v383, %v386
      %v388 = vadd.f32 %v382, %v387
      %389 = vst [vmem:[%s168] sm:$0xff] %v388
      %p390 = scmp.lt.s32.totalorder %s14, 3
      %s391 = scalar_select %p390, %s14, 3
      %s392 = smul.addr %s391, 8
      %s393 = scalar_lea.vmem %s3, %s392
      // Predicated region
      $region33: #{conv_token_embedding.1} parent=31 // pred_check
        %p394 = pneg %p100
      $region34: #{conv_token_embedding.1} parent=31 // pred_check_branch
        %396 = sbr.rel (%p394) target = $region36
      $region35: #{conv_token_embedding.1} parent=31 // pred_region
        _
      $region36: #{conv_token_embedding.1} parent=31 // pred_fallthru
        _
    $region32: #{conv_token_embedding.1} parent=5 // pred_fallthru
      _
    %p397 = scmp.le.s32.totalorder 2, %s9
    // Predicated region
    $region37: #{conv_token_embedding.1} parent=5 // pred_check
      %p398 = pneg %p397
    $region38: #{conv_token_embedding.1} parent=5 // pred_check_branch
      %400 = sbr.rel (%p398) target = $region40
    $region39: #{conv_token_embedding.1} parent=5 // pred_region
      %s401 = ssub.s32 %s9, 2
      // Predicated region
      $region41: #{conv_token_embedding.1} parent=39 // pred_check
        %p402 = pneg %p106
      $region42: #{conv_token_embedding.1} parent=39 // pred_check_branch
        %404 = sbr.rel (%p402) target = $region44
      $region43: #{conv_token_embedding.1} parent=39 // pred_region
        %p405 = scmp.lt.s32.totalorder %s15, 3
        %s406 = scalar_select %p405, %s15, 3
        %s407 = smul.addr %s406, 8
        %s408 = scalar_lea.vmem %s3, %s407
      $region44: #{conv_token_embedding.1} parent=39 // pred_fallthru
        _
    $region40: #{conv_token_embedding.1} parent=5 // pred_fallthru
      _
  $region6: #{conv_token_embedding.1} parent=0 // loop_footer
    %s13 = sadd.s32 1, %s9
  $region7: #{conv_token_embedding.1} parent=0 // loop_footer_branch
    %8 = sbr.rel target = $region3
  $region8: #{conv_token_embedding.1} parent=0 // loop_exit
    _

</llo_original>
